<compile_context>
chip_gen: v5e
topology: v5e:2x2
jax: 0.10.0
libtpu: 0.0.40
codegen_flags: <defaults>
</compile_context>

<pallas_src>
import math
import functools

import jax
import jax.numpy as jnp
from jax.experimental import pallas as pl
from jax.experimental.pallas import tpu as pltpu


def _mha_kernel(q_ref, k_ref, v_ref,
                wq_ref, bq_ref, wk_ref, bk_ref, wv_ref, bv_ref,
                wo_ref, bo_ref,
                o_ref,
                *, n_head, d_k, d_v):
    """One grid step == one batch tile of `tb` batch elements.

    Refs:
      q_ref/k_ref/v_ref : (tb, S, D)        compute dtype (f32 or bf16)
      wq_ref/wk_ref     : (D, H*d_k)        compute dtype (wq pre-scaled by 1/sqrt(d_k))
      wv_ref            : (D, H*d_v)        compute dtype
      wo_ref            : (H*d_v, D_pad)    compute dtype, D_pad = D rounded up to 128
      bq/bk/bv/bo refs  : (1, ...)          float32
      o_ref             : (tb, S, D_pad)
    """
    tb, s_q, d_feature = q_ref.shape
    s_kv = k_ref.shape[1]
    d_out = o_ref.shape[-1]
    cdt = q_ref.dtype

    # ---- Fused Q/K/V projections: one matmul each across the whole batch
    # tile (lane width H*d_k / H*d_v instead of d_k per head).  f32 MXU
    # accumulation + f32 bias add, then a single cast to the compute dtype.
    q2 = q_ref[...].reshape(tb * s_q, d_feature)
    k2 = k_ref[...].reshape(tb * s_kv, d_feature)
    v2 = v_ref[...].reshape(tb * s_kv, d_feature)

    qp = (jnp.dot(q2, wq_ref[...], preferred_element_type=jnp.float32)
          + bq_ref[...]).astype(cdt)                         # (tb*S_q,  H*d_k)
    kp = (jnp.dot(k2, wk_ref[...], preferred_element_type=jnp.float32)
          + bk_ref[...]).astype(cdt)                         # (tb*S_kv, H*d_k)
    vp = (jnp.dot(v2, wv_ref[...], preferred_element_type=jnp.float32)
          + bv_ref[...]).astype(cdt)                         # (tb*S_kv, H*d_v)

    # ---- Per-head attention.  Heads are tiny here; static unroll.
    # TODO(synk): switch to lax.fori_loop(..., unroll=True) / a head grid
    # axis once n_head*d_k reaches realistic sizes (bounds live ranges).
    head_outs = []
    for h in range(n_head):
        qh = qp[:, h * d_k:(h + 1) * d_k].reshape(tb, s_q, d_k)
        kh = kp[:, h * d_k:(h + 1) * d_k].reshape(tb, s_kv, d_k)
        vh = vp[:, h * d_v:(h + 1) * d_v].reshape(tb, s_kv, d_v)

        # Scores (tb, S_q, S_kv); K "transpose" folded into the contraction
        # (no explicit XLU transpose).
        s = jnp.einsum('bqd,bkd->bqk', qh, kh,
                       preferred_element_type=jnp.float32)

        # PyTorch: torch.softmax(scores, dim=-2) -> softmax over the QUERY
        # axis (each key column is normalized independently over queries).
        s = s - jnp.max(s, axis=-2, keepdims=True)
        e = jnp.exp(s)
        p = e * pl.reciprocal(jnp.sum(e, axis=-2, keepdims=True), approx=True)

        ho = jnp.einsum('bqk,bkd->bqd', p.astype(cdt), vh,
                        preferred_element_type=jnp.float32)  # (tb, S_q, d_v)
        head_outs.append(ho.reshape(tb * s_q, d_v))

    # ---- Fused "concat heads + output Linear": one lane-dense matmul into
    # the 128-padded output slab, then an unmasked full-lane store.
    ho_cat = jnp.concatenate(head_outs, axis=-1).astype(cdt)  # (tb*S_q, H*d_v)
    out = jnp.dot(ho_cat, wo_ref[...],
                  preferred_element_type=jnp.float32) + bo_ref[...]
    o_ref[...] = out.reshape(tb, s_q, d_out).astype(o_ref.dtype)


def multi_head_attention(q, k, v, params, *, n_head, d_k, d_v,
                         compute_dtype=jnp.bfloat16, batch_tile=None):
    """q: (bs, S_q, d_feature); k, v: (bs, S_kv, d_feature).

    compute_dtype: dtype fed to the MXU matmuls.  bf16 by default (the right
    choice on v5e/v6e/v7x); accumulation, bias adds and softmax stay f32.
    batch_tile: batch elements per grid step (must divide bs).
    """
    bs, s_q, d_feature = q.shape
    _, s_kv, _ = k.shape
    wq, bq, wk, bk, wv, bv, wo, bo = params

    # Batch tile: several batch elements per grid step amortize per-step
    # pipeline overhead; keep >= 2 grid steps when possible so both v7x
    # TensorCores get work (harmless on single-TC v5e/v6e).
    if batch_tile is None:
        batch_tile = bs // 2 if (bs >= 2 and bs % 2 == 0) else 1
    tb = batch_tile
    if bs % tb != 0:
        raise ValueError("batch_tile must divide the batch size")

    cdt = compute_dtype
    inv_sqrt_dk = 1.0 / math.sqrt(d_k)

    # Lane-dense output: pad output feature dim to a multiple of 128 so the
    # kernel's epilogue store is unmasked; slice the pad off afterwards.
    d_out = ((d_feature + 127) // 128) * 128

    # ---- wrapper-side weight prep (layout plumbing only) -------------------
    wq_s = (wq * inv_sqrt_dk).astype(cdt)                 # fold 1/sqrt(d_k)
    bq_s = (bq * inv_sqrt_dk).reshape(1, n_head * d_k).astype(jnp.float32)
    wk_c = wk.astype(cdt)
    bk_c = bk.reshape(1, n_head * d_k).astype(jnp.float32)
    wv_c = wv.astype(cdt)
    bv_c = bv.reshape(1, n_head * d_v).astype(jnp.float32)
    if d_out == d_feature:
        wo_p = wo.astype(cdt)
        bo_p = bo.reshape(1, d_feature).astype(jnp.float32)
    else:
        wo_p = jnp.zeros((n_head * d_v, d_out), cdt).at[:, :d_feature].set(
            wo.astype(cdt))
        bo_p = jnp.zeros((1, d_out), jnp.float32).at[:, :d_feature].set(
            bo.reshape(1, d_feature).astype(jnp.float32))

    q_c = q.astype(cdt)
    k_c = k.astype(cdt)
    v_c = v.astype(cdt)

    kernel = functools.partial(_mha_kernel, n_head=n_head, d_k=d_k, d_v=d_v)

    q_spec = pl.BlockSpec((tb, s_q, d_feature), lambda b: (b, 0, 0))
    kv_spec = pl.BlockSpec((tb, s_kv, d_feature), lambda b: (b, 0, 0))
    out_spec = pl.BlockSpec((tb, s_q, d_out), lambda b: (b, 0, 0))

    def const_spec(arr):
        # Constant-index weight/bias block (same tile every grid step; the
        # pipeline does not re-fetch it).
        # TODO(synk): at production sizes single-buffer these with
        # pipeline_mode=pl.Buffered(1) to halve their VMEM footprint
        # (matters on v7x's 64 MiB VMEM; irrelevant at these shapes).
        return pl.BlockSpec(arr.shape, lambda b, _nd=arr.ndim: (0,) * _nd)

    # Advisory cost estimate (helps XLA schedule around the custom call).
    flops = bs * (
        2 * s_q * d_feature * n_head * d_k        # Q projection
        + 2 * s_kv * d_feature * n_head * d_k     # K projection
        + 2 * s_kv * d_feature * n_head * d_v     # V projection
        + 2 * n_head * s_q * s_kv * d_k           # scores
        + 2 * n_head * s_q * s_kv * d_v           # attn @ V
        + 2 * s_q * n_head * d_v * d_out          # output projection
    )
    transcendentals = bs * n_head * s_q * s_kv    # exp
    act_bytes = jnp.dtype(cdt).itemsize
    bytes_accessed = (
        (q_c.size + k_c.size + v_c.size) * act_bytes
        + bs * s_q * d_out * jnp.dtype(q.dtype).itemsize
        + (wq_s.size + wk_c.size + wv_c.size + wo_p.size) * act_bytes
        + (bq_s.size + bk_c.size + bv_c.size + bo_p.size) * 4
    )

    out_padded = pl.pallas_call(
        kernel,
        out_shape=jax.ShapeDtypeStruct((bs, s_q, d_out), q.dtype),
        grid_spec=pltpu.PrefetchScalarGridSpec(
            num_scalar_prefetch=0,
            grid=(bs // tb,),
            in_specs=[
                q_spec, kv_spec, kv_spec,
                const_spec(wq_s), const_spec(bq_s),
                const_spec(wk_c), const_spec(bk_c),
                const_spec(wv_c), const_spec(bv_c),
                const_spec(wo_p), const_spec(bo_p),
            ],
            out_specs=out_spec,
        ),
        compiler_params=pltpu.CompilerParams(
            dimension_semantics=("parallel",)),
        cost_estimate=pl.CostEstimate(
            flops=int(flops),
            transcendentals=int(transcendentals),
            bytes_accessed=int(bytes_accessed)),
    )(q_c, k_c, v_c, wq_s, bq_s, wk_c, bk_c, wv_c, bv_c, wo_p, bo_p)

    if d_out == d_feature:
        return out_padded
    return out_padded[..., :d_feature]


def _reference(q, k, v, params, *, n_head, d_k, d_v):
    """Pure-JAX reference mirroring the PyTorch forward (eval mode)."""
    wq, bq, wk, bk, wv, bv, wo, bo = params
    bs, s, _ = q.shape
    Q = (q @ wq + bq).reshape(bs, s, n_head, d_k).transpose(0, 2, 1, 3)
    K = (k @ wk + bk).reshape(bs, k.shape[1], n_head, d_k).transpose(0, 2, 1, 3)
    V = (v @ wv + bv).reshape(bs, v.shape[1], n_head, d_v).transpose(0, 2, 1, 3)
    scores = jnp.einsum('bhqd,bhkd->bhqk', Q, K) / math.sqrt(d_k)
    scores = jax.nn.softmax(scores, axis=-2)   # dim=-2, as in the PyTorch code
    out = jnp.einsum('bhqk,bhkd->bhqd', scores, V)
    out = out.transpose(0, 2, 1, 3).reshape(bs, s, n_head * d_v)
    return out @ wo + bo


if __name__ == "__main__":
    # Small shapes consistent with the module.
    bs, seq, d_feature = 2, 8, 32
    n_head, d_k, d_v = 4, 8, 8

    key = jax.random.PRNGKey(0)
    keys = jax.random.split(key, 12)

    def linear_params(kw, kb, fan_in, fan_out):
        # Deterministic init mimicking nn.Linear's uniform(-1/sqrt(fan_in), ...).
        bound = 1.0 / math.sqrt(fan_in)
        w = jax.random.uniform(kw, (fan_in, fan_out), jnp.float32, -bound, bound)
        b = jax.random.uniform(kb, (1, fan_out), jnp.float32, -bound, bound)
        return w, b

    wq, bq = linear_params(keys[0], keys[1], d_feature, n_head * d_k)
    wk, bk = linear_params(keys[2], keys[3], d_feature, n_head * d_k)
    wv, bv = linear_params(keys[4], keys[5], d_feature, n_head * d_v)
    wo, bo = linear_params(keys[6], keys[7], n_head * d_v, d_feature)
    params = (wq, bq, wk, bk, wv, bv, wo, bo)

    q = jax.random.normal(keys[8], (bs, seq, d_feature), jnp.float32)
    k = jax.random.normal(keys[9], (bs, seq, d_feature), jnp.float32)
    v = jax.random.normal(keys[10], (bs, seq, d_feature), jnp.float32)

    ref = _reference(q, k, v, params, n_head=n_head, d_k=d_k, d_v=d_v)

    # float32 MXU path.  Tolerance accounts for the approximate EUP
    # reciprocal used in the softmax denominator.
    out_f32 = multi_head_attention(q, k, v, params, n_head=n_head, d_k=d_k,
                                   d_v=d_v, compute_dtype=jnp.float32)
    out_f32 = jax.block_until_ready(out_f32)
    assert out_f32.shape == (bs, seq, d_feature)
    assert jnp.allclose(out_f32, ref, atol=1e-2, rtol=1e-2), \
        "f32 kernel mismatch vs JAX reference"

    # Default bf16 MXU path (recommended on v5e/v6e/v7x): looser tolerance.
    out_bf16 = multi_head_attention(q, k, v, params, n_head=n_head, d_k=d_k,
                                    d_v=d_v)
    out_bf16 = jax.block_until_ready(out_bf16)
    assert out_bf16.shape == (bs, seq, d_feature)
    assert jnp.allclose(out_bf16, ref, atol=6e-2, rtol=6e-2), \
        "bf16 kernel mismatch vs JAX reference"

    print("KERNEL_OK")
</pallas_src>

<mosaic_0001>
module attributes {stable_mosaic.version = 11 : i64} {
  func.func @_mha_kernel(%arg0: i32, %arg1: memref<1x8x32xf32, #tpu.memory_space<vmem>>, %arg2: memref<1x8x32xf32, #tpu.memory_space<vmem>>, %arg3: memref<1x8x32xf32, #tpu.memory_space<vmem>>, %arg4: memref<32x32xf32, #tpu.memory_space<vmem>>, %arg5: memref<1x32xf32, #tpu.memory_space<vmem>>, %arg6: memref<32x32xf32, #tpu.memory_space<vmem>>, %arg7: memref<1x32xf32, #tpu.memory_space<vmem>>, %arg8: memref<32x32xf32, #tpu.memory_space<vmem>>, %arg9: memref<1x32xf32, #tpu.memory_space<vmem>>, %arg10: memref<32x128xf32, #tpu.memory_space<vmem>>, %arg11: memref<1x128xf32, #tpu.memory_space<vmem>>, %arg12: memref<1x8x128xf32, #tpu.memory_space<vmem>>) attributes {dimension_semantics = [#tpu.dimension_semantics<parallel>], iteration_bounds = array<i64: 2>, scalar_prefetch = 0 : i64, scratch_operands = 0 : i64, tpu.core_type = #tpu.core_type<tc>, window_params = [{transform_indices = @transform_0, window_bounds = array<i64: 1, 8, 32>}, {transform_indices = @transform_1, window_bounds = array<i64: 1, 8, 32>}, {transform_indices = @transform_2, window_bounds = array<i64: 1, 8, 32>}, {pipeline_mode = #tpu.pipeline_mode<synchronous>, transform_indices = @transform_3, window_bounds = array<i64: 32, 32>}, {pipeline_mode = #tpu.pipeline_mode<synchronous>, transform_indices = @transform_4, window_bounds = array<i64: 1, 32>}, {pipeline_mode = #tpu.pipeline_mode<synchronous>, transform_indices = @transform_5, window_bounds = array<i64: 32, 32>}, {pipeline_mode = #tpu.pipeline_mode<synchronous>, transform_indices = @transform_6, window_bounds = array<i64: 1, 32>}, {pipeline_mode = #tpu.pipeline_mode<synchronous>, transform_indices = @transform_7, window_bounds = array<i64: 32, 32>}, {pipeline_mode = #tpu.pipeline_mode<synchronous>, transform_indices = @transform_8, window_bounds = array<i64: 1, 32>}, {pipeline_mode = #tpu.pipeline_mode<synchronous>, transform_indices = @transform_9, window_bounds = array<i64: 32, 128>}, {pipeline_mode = #tpu.pipeline_mode<synchronous>, transform_indices = @transform_10, window_bounds = array<i64: 1, 128>}, {transform_indices = @transform_11, window_bounds = array<i64: 1, 8, 128>}]} {
    %c0 = arith.constant 0 : index
    %c0_0 = arith.constant 0 : index
    %c0_1 = arith.constant 0 : index
    %0 = vector.load %arg1[%c0, %c0_0, %c0_1] : memref<1x8x32xf32, #tpu.memory_space<vmem>>, vector<1x8x32xf32>
    %1 = vector.shape_cast %0 : vector<1x8x32xf32> to vector<8x32xf32>
    %c0_2 = arith.constant 0 : index
    %c0_3 = arith.constant 0 : index
    %c0_4 = arith.constant 0 : index
    %2 = vector.load %arg2[%c0_2, %c0_3, %c0_4] : memref<1x8x32xf32, #tpu.memory_space<vmem>>, vector<1x8x32xf32>
    %3 = vector.shape_cast %2 : vector<1x8x32xf32> to vector<8x32xf32>
    %c0_5 = arith.constant 0 : index
    %c0_6 = arith.constant 0 : index
    %c0_7 = arith.constant 0 : index
    %4 = vector.load %arg3[%c0_5, %c0_6, %c0_7] : memref<1x8x32xf32, #tpu.memory_space<vmem>>, vector<1x8x32xf32>
    %5 = vector.shape_cast %4 : vector<1x8x32xf32> to vector<8x32xf32>
    %c0_8 = arith.constant 0 : index
    %c0_9 = arith.constant 0 : index
    %6 = vector.load %arg4[%c0_8, %c0_9] : memref<32x32xf32, #tpu.memory_space<vmem>>, vector<32x32xf32>
    %cst = arith.constant dense<0.000000e+00> : vector<8x32xf32>
    %7 = tpu.matmul %1, %6, %cst {dimension_numbers = #tpu.dot_dimension_numbers<[1], [0], [0], [1], [0, 0, 1, 1], [], []>} : vector<8x32xf32>, vector<32x32xf32>, vector<8x32xf32> -> vector<8x32xf32>
    %c0_10 = arith.constant 0 : index
    %c0_11 = arith.constant 0 : index
    %8 = vector.load %arg5[%c0_10, %c0_11] : memref<1x32xf32, #tpu.memory_space<vmem>>, vector<1x32xf32>
    %9 = vector.broadcast %8 : vector<1x32xf32> to vector<8x32xf32>
    %10 = arith.addf %7, %9 : vector<8x32xf32>
    %c0_12 = arith.constant 0 : index
    %c0_13 = arith.constant 0 : index
    %11 = vector.load %arg6[%c0_12, %c0_13] : memref<32x32xf32, #tpu.memory_space<vmem>>, vector<32x32xf32>
    %cst_14 = arith.constant dense<0.000000e+00> : vector<8x32xf32>
    %12 = tpu.matmul %3, %11, %cst_14 {dimension_numbers = #tpu.dot_dimension_numbers<[1], [0], [0], [1], [0, 0, 1, 1], [], []>} : vector<8x32xf32>, vector<32x32xf32>, vector<8x32xf32> -> vector<8x32xf32>
    %c0_15 = arith.constant 0 : index
    %c0_16 = arith.constant 0 : index
    %13 = vector.load %arg7[%c0_15, %c0_16] : memref<1x32xf32, #tpu.memory_space<vmem>>, vector<1x32xf32>
    %14 = vector.broadcast %13 : vector<1x32xf32> to vector<8x32xf32>
    %15 = arith.addf %12, %14 : vector<8x32xf32>
    %c0_17 = arith.constant 0 : index
    %c0_18 = arith.constant 0 : index
    %16 = vector.load %arg8[%c0_17, %c0_18] : memref<32x32xf32, #tpu.memory_space<vmem>>, vector<32x32xf32>
    %cst_19 = arith.constant dense<0.000000e+00> : vector<8x32xf32>
    %17 = tpu.matmul %5, %16, %cst_19 {dimension_numbers = #tpu.dot_dimension_numbers<[1], [0], [0], [1], [0, 0, 1, 1], [], []>} : vector<8x32xf32>, vector<32x32xf32>, vector<8x32xf32> -> vector<8x32xf32>
    %c0_20 = arith.constant 0 : index
    %c0_21 = arith.constant 0 : index
    %18 = vector.load %arg9[%c0_20, %c0_21] : memref<1x32xf32, #tpu.memory_space<vmem>>, vector<1x32xf32>
    %19 = vector.broadcast %18 : vector<1x32xf32> to vector<8x32xf32>
    %20 = arith.addf %17, %19 : vector<8x32xf32>
    %21 = vector.extract_strided_slice %10 {offsets = [0, 0], sizes = [8, 8], strides = [1, 1]} : vector<8x32xf32> to vector<8x8xf32>
    %22 = vector.shape_cast %21 : vector<8x8xf32> to vector<1x8x8xf32>
    %23 = vector.extract_strided_slice %15 {offsets = [0, 0], sizes = [8, 8], strides = [1, 1]} : vector<8x32xf32> to vector<8x8xf32>
    %24 = vector.shape_cast %23 : vector<8x8xf32> to vector<1x8x8xf32>
    %25 = vector.extract_strided_slice %20 {offsets = [0, 0], sizes = [8, 8], strides = [1, 1]} : vector<8x32xf32> to vector<8x8xf32>
    %26 = vector.shape_cast %25 : vector<8x8xf32> to vector<1x8x8xf32>
    "tpu.trace_start"() <{level = 10 : i32, message = "bqd,bkd->bqk"}> : () -> ()
    %cst_22 = arith.constant dense<0.000000e+00> : vector<1x8x8xf32>
    %27 = tpu.matmul %22, %24, %cst_22 {dimension_numbers = #tpu.dot_dimension_numbers<[2], [2], [1], [1], [0, 0, 0, 1, 1, 1], [0], [0]>} : vector<1x8x8xf32>, vector<1x8x8xf32>, vector<1x8x8xf32> -> vector<1x8x8xf32>
    "tpu.trace_stop"() : () -> ()
    %cst_23 = arith.constant dense<0xFF800000> : vector<1x8xf32>
    %28 = vector.multi_reduction <maximumf>, %27, %cst_23 [1] : vector<1x8x8xf32> to vector<1x8xf32>
    %29 = vector.shape_cast %28 : vector<1x8xf32> to vector<1x1x8xf32>
    %30 = vector.broadcast %29 : vector<1x1x8xf32> to vector<1x8x8xf32>
    %31 = arith.subf %27, %30 : vector<1x8x8xf32>
    %32 = math.exp %31 : vector<1x8x8xf32>
    %cst_24 = arith.constant dense<0.000000e+00> : vector<1x8xf32>
    %33 = vector.multi_reduction <add>, %32, %cst_24 [1] : vector<1x8x8xf32> to vector<1x8xf32>
    %34 = vector.shape_cast %33 : vector<1x8xf32> to vector<1x1x8xf32>
    %35 = tpu.reciprocal %34 {approx = true} : vector<1x1x8xf32> -> vector<1x1x8xf32>
    %36 = vector.broadcast %35 : vector<1x1x8xf32> to vector<1x8x8xf32>
    %37 = arith.mulf %32, %36 : vector<1x8x8xf32>
    "tpu.trace_start"() <{level = 10 : i32, message = "bqk,bkd->bqd"}> : () -> ()
    %cst_25 = arith.constant dense<0.000000e+00> : vector<1x8x8xf32>
    %38 = tpu.matmul %37, %26, %cst_25 {dimension_numbers = #tpu.dot_dimension_numbers<[2], [1], [1], [2], [0, 0, 0, 1, 1, 2], [0], [0]>} : vector<1x8x8xf32>, vector<1x8x8xf32>, vector<1x8x8xf32> -> vector<1x8x8xf32>
    "tpu.trace_stop"() : () -> ()
    %39 = vector.shape_cast %38 : vector<1x8x8xf32> to vector<8x8xf32>
    %40 = vector.extract_strided_slice %10 {offsets = [0, 8], sizes = [8, 8], strides = [1, 1]} : vector<8x32xf32> to vector<8x8xf32>
    %41 = vector.shape_cast %40 : vector<8x8xf32> to vector<1x8x8xf32>
    %42 = vector.extract_strided_slice %15 {offsets = [0, 8], sizes = [8, 8], strides = [1, 1]} : vector<8x32xf32> to vector<8x8xf32>
    %43 = vector.shape_cast %42 : vector<8x8xf32> to vector<1x8x8xf32>
    %44 = vector.extract_strided_slice %20 {offsets = [0, 8], sizes = [8, 8], strides = [1, 1]} : vector<8x32xf32> to vector<8x8xf32>
    %45 = vector.shape_cast %44 : vector<8x8xf32> to vector<1x8x8xf32>
    "tpu.trace_start"() <{level = 10 : i32, message = "bqd,bkd->bqk"}> : () -> ()
    %cst_26 = arith.constant dense<0.000000e+00> : vector<1x8x8xf32>
    %46 = tpu.matmul %41, %43, %cst_26 {dimension_numbers = #tpu.dot_dimension_numbers<[2], [2], [1], [1], [0, 0, 0, 1, 1, 1], [0], [0]>} : vector<1x8x8xf32>, vector<1x8x8xf32>, vector<1x8x8xf32> -> vector<1x8x8xf32>
    "tpu.trace_stop"() : () -> ()
    %cst_27 = arith.constant dense<0xFF800000> : vector<1x8xf32>
    %47 = vector.multi_reduction <maximumf>, %46, %cst_27 [1] : vector<1x8x8xf32> to vector<1x8xf32>
    %48 = vector.shape_cast %47 : vector<1x8xf32> to vector<1x1x8xf32>
    %49 = vector.broadcast %48 : vector<1x1x8xf32> to vector<1x8x8xf32>
    %50 = arith.subf %46, %49 : vector<1x8x8xf32>
    %51 = math.exp %50 : vector<1x8x8xf32>
    %cst_28 = arith.constant dense<0.000000e+00> : vector<1x8xf32>
    %52 = vector.multi_reduction <add>, %51, %cst_28 [1] : vector<1x8x8xf32> to vector<1x8xf32>
    %53 = vector.shape_cast %52 : vector<1x8xf32> to vector<1x1x8xf32>
    %54 = tpu.reciprocal %53 {approx = true} : vector<1x1x8xf32> -> vector<1x1x8xf32>
    %55 = vector.broadcast %54 : vector<1x1x8xf32> to vector<1x8x8xf32>
    %56 = arith.mulf %51, %55 : vector<1x8x8xf32>
    "tpu.trace_start"() <{level = 10 : i32, message = "bqk,bkd->bqd"}> : () -> ()
    %cst_29 = arith.constant dense<0.000000e+00> : vector<1x8x8xf32>
    %57 = tpu.matmul %56, %45, %cst_29 {dimension_numbers = #tpu.dot_dimension_numbers<[2], [1], [1], [2], [0, 0, 0, 1, 1, 2], [0], [0]>} : vector<1x8x8xf32>, vector<1x8x8xf32>, vector<1x8x8xf32> -> vector<1x8x8xf32>
    "tpu.trace_stop"() : () -> ()
    %58 = vector.shape_cast %57 : vector<1x8x8xf32> to vector<8x8xf32>
    %59 = vector.extract_strided_slice %10 {offsets = [0, 16], sizes = [8, 8], strides = [1, 1]} : vector<8x32xf32> to vector<8x8xf32>
    %60 = vector.shape_cast %59 : vector<8x8xf32> to vector<1x8x8xf32>
    %61 = vector.extract_strided_slice %15 {offsets = [0, 16], sizes = [8, 8], strides = [1, 1]} : vector<8x32xf32> to vector<8x8xf32>
    %62 = vector.shape_cast %61 : vector<8x8xf32> to vector<1x8x8xf32>
    %63 = vector.extract_strided_slice %20 {offsets = [0, 16], sizes = [8, 8], strides = [1, 1]} : vector<8x32xf32> to vector<8x8xf32>
    %64 = vector.shape_cast %63 : vector<8x8xf32> to vector<1x8x8xf32>
    "tpu.trace_start"() <{level = 10 : i32, message = "bqd,bkd->bqk"}> : () -> ()
    %cst_30 = arith.constant dense<0.000000e+00> : vector<1x8x8xf32>
    %65 = tpu.matmul %60, %62, %cst_30 {dimension_numbers = #tpu.dot_dimension_numbers<[2], [2], [1], [1], [0, 0, 0, 1, 1, 1], [0], [0]>} : vector<1x8x8xf32>, vector<1x8x8xf32>, vector<1x8x8xf32> -> vector<1x8x8xf32>
    "tpu.trace_stop"() : () -> ()
    %cst_31 = arith.constant dense<0xFF800000> : vector<1x8xf32>
    %66 = vector.multi_reduction <maximumf>, %65, %cst_31 [1] : vector<1x8x8xf32> to vector<1x8xf32>
    %67 = vector.shape_cast %66 : vector<1x8xf32> to vector<1x1x8xf32>
    %68 = vector.broadcast %67 : vector<1x1x8xf32> to vector<1x8x8xf32>
    %69 = arith.subf %65, %68 : vector<1x8x8xf32>
    %70 = math.exp %69 : vector<1x8x8xf32>
    %cst_32 = arith.constant dense<0.000000e+00> : vector<1x8xf32>
    %71 = vector.multi_reduction <add>, %70, %cst_32 [1] : vector<1x8x8xf32> to vector<1x8xf32>
    %72 = vector.shape_cast %71 : vector<1x8xf32> to vector<1x1x8xf32>
    %73 = tpu.reciprocal %72 {approx = true} : vector<1x1x8xf32> -> vector<1x1x8xf32>
    %74 = vector.broadcast %73 : vector<1x1x8xf32> to vector<1x8x8xf32>
    %75 = arith.mulf %70, %74 : vector<1x8x8xf32>
    "tpu.trace_start"() <{level = 10 : i32, message = "bqk,bkd->bqd"}> : () -> ()
    %cst_33 = arith.constant dense<0.000000e+00> : vector<1x8x8xf32>
    %76 = tpu.matmul %75, %64, %cst_33 {dimension_numbers = #tpu.dot_dimension_numbers<[2], [1], [1], [2], [0, 0, 0, 1, 1, 2], [0], [0]>} : vector<1x8x8xf32>, vector<1x8x8xf32>, vector<1x8x8xf32> -> vector<1x8x8xf32>
    "tpu.trace_stop"() : () -> ()
    %77 = vector.shape_cast %76 : vector<1x8x8xf32> to vector<8x8xf32>
    %78 = vector.extract_strided_slice %10 {offsets = [0, 24], sizes = [8, 8], strides = [1, 1]} : vector<8x32xf32> to vector<8x8xf32>
    %79 = vector.shape_cast %78 : vector<8x8xf32> to vector<1x8x8xf32>
    %80 = vector.extract_strided_slice %15 {offsets = [0, 24], sizes = [8, 8], strides = [1, 1]} : vector<8x32xf32> to vector<8x8xf32>
    %81 = vector.shape_cast %80 : vector<8x8xf32> to vector<1x8x8xf32>
    %82 = vector.extract_strided_slice %20 {offsets = [0, 24], sizes = [8, 8], strides = [1, 1]} : vector<8x32xf32> to vector<8x8xf32>
    %83 = vector.shape_cast %82 : vector<8x8xf32> to vector<1x8x8xf32>
    "tpu.trace_start"() <{level = 10 : i32, message = "bqd,bkd->bqk"}> : () -> ()
    %cst_34 = arith.constant dense<0.000000e+00> : vector<1x8x8xf32>
    %84 = tpu.matmul %79, %81, %cst_34 {dimension_numbers = #tpu.dot_dimension_numbers<[2], [2], [1], [1], [0, 0, 0, 1, 1, 1], [0], [0]>} : vector<1x8x8xf32>, vector<1x8x8xf32>, vector<1x8x8xf32> -> vector<1x8x8xf32>
    "tpu.trace_stop"() : () -> ()
    %cst_35 = arith.constant dense<0xFF800000> : vector<1x8xf32>
    %85 = vector.multi_reduction <maximumf>, %84, %cst_35 [1] : vector<1x8x8xf32> to vector<1x8xf32>
    %86 = vector.shape_cast %85 : vector<1x8xf32> to vector<1x1x8xf32>
    %87 = vector.broadcast %86 : vector<1x1x8xf32> to vector<1x8x8xf32>
    %88 = arith.subf %84, %87 : vector<1x8x8xf32>
    %89 = math.exp %88 : vector<1x8x8xf32>
    %cst_36 = arith.constant dense<0.000000e+00> : vector<1x8xf32>
    %90 = vector.multi_reduction <add>, %89, %cst_36 [1] : vector<1x8x8xf32> to vector<1x8xf32>
    %91 = vector.shape_cast %90 : vector<1x8xf32> to vector<1x1x8xf32>
    %92 = tpu.reciprocal %91 {approx = true} : vector<1x1x8xf32> -> vector<1x1x8xf32>
    %93 = vector.broadcast %92 : vector<1x1x8xf32> to vector<1x8x8xf32>
    %94 = arith.mulf %89, %93 : vector<1x8x8xf32>
    "tpu.trace_start"() <{level = 10 : i32, message = "bqk,bkd->bqd"}> : () -> ()
    %cst_37 = arith.constant dense<0.000000e+00> : vector<1x8x8xf32>
    %95 = tpu.matmul %94, %83, %cst_37 {dimension_numbers = #tpu.dot_dimension_numbers<[2], [1], [1], [2], [0, 0, 0, 1, 1, 2], [0], [0]>} : vector<1x8x8xf32>, vector<1x8x8xf32>, vector<1x8x8xf32> -> vector<1x8x8xf32>
    "tpu.trace_stop"() : () -> ()
    %96 = vector.shape_cast %95 : vector<1x8x8xf32> to vector<8x8xf32>
    %97 = tpu.concatenate %39, %58, %77, %96 in 1 : vector<8x8xf32>, vector<8x8xf32>, vector<8x8xf32>, vector<8x8xf32> -> vector<8x32xf32>
    %c0_38 = arith.constant 0 : index
    %c0_39 = arith.constant 0 : index
    %98 = vector.load %arg10[%c0_38, %c0_39] : memref<32x128xf32, #tpu.memory_space<vmem>>, vector<32x128xf32>
    %cst_40 = arith.constant dense<0.000000e+00> : vector<8x128xf32>
    %99 = tpu.matmul %97, %98, %cst_40 {dimension_numbers = #tpu.dot_dimension_numbers<[1], [0], [0], [1], [0, 0, 1, 1], [], []>} : vector<8x32xf32>, vector<32x128xf32>, vector<8x128xf32> -> vector<8x128xf32>
    %c0_41 = arith.constant 0 : index
    %c0_42 = arith.constant 0 : index
    %100 = vector.load %arg11[%c0_41, %c0_42] : memref<1x128xf32, #tpu.memory_space<vmem>>, vector<1x128xf32>
    %101 = vector.broadcast %100 : vector<1x128xf32> to vector<8x128xf32>
    %102 = arith.addf %99, %101 : vector<8x128xf32>
    %103 = vector.shape_cast %102 : vector<8x128xf32> to vector<1x8x128xf32>
    %c0_43 = arith.constant 0 : index
    %c0_44 = arith.constant 0 : index
    %c0_45 = arith.constant 0 : index
    %104 = vector.load %arg12[%c0_43, %c0_44, %c0_45] : memref<1x8x128xf32, #tpu.memory_space<vmem>>, vector<1x8x128xf32>
    tpu.vector_store %arg12[%c0_43, %c0_44, %c0_45], %103 {strides = array<i32>} : memref<1x8x128xf32, #tpu.memory_space<vmem>>, vector<1x8x128xf32>,
    return
  }
  func.func @transform_0(%arg0: i32) -> (i32, i32, i32) {
    %c0_i32 = arith.constant 0 : i32
    %c0_i32_0 = arith.constant 0 : i32
    %c0_i32_1 = arith.constant 0 : i32
    return %arg0, %c0_i32, %c0_i32_0 : i32, i32, i32
  }
  func.func @transform_1(%arg0: i32) -> (i32, i32, i32) {
    %c0_i32 = arith.constant 0 : i32
    %c0_i32_0 = arith.constant 0 : i32
    %c0_i32_1 = arith.constant 0 : i32
    return %arg0, %c0_i32, %c0_i32_0 : i32, i32, i32
  }
  func.func @transform_2(%arg0: i32) -> (i32, i32, i32) {
    %c0_i32 = arith.constant 0 : i32
    %c0_i32_0 = arith.constant 0 : i32
    %c0_i32_1 = arith.constant 0 : i32
    return %arg0, %c0_i32, %c0_i32_0 : i32, i32, i32
  }
  func.func @transform_3(%arg0: i32) -> (i32, i32) {
    %c0_i32 = arith.constant 0 : i32
    %c0_i32_0 = arith.constant 0 : i32
    %c0_i32_1 = arith.constant 0 : i32
    return %c0_i32, %c0_i32_0 : i32, i32
  }
  func.func @transform_4(%arg0: i32) -> (i32, i32) {
    %c0_i32 = arith.constant 0 : i32
    %c0_i32_0 = arith.constant 0 : i32
    %c0_i32_1 = arith.constant 0 : i32
    return %c0_i32, %c0_i32_0 : i32, i32
  }
  func.func @transform_5(%arg0: i32) -> (i32, i32) {
    %c0_i32 = arith.constant 0 : i32
    %c0_i32_0 = arith.constant 0 : i32
    %c0_i32_1 = arith.constant 0 : i32
    return %c0_i32, %c0_i32_0 : i32, i32
  }
  func.func @transform_6(%arg0: i32) -> (i32, i32) {
    %c0_i32 = arith.constant 0 : i32
    %c0_i32_0 = arith.constant 0 : i32
    %c0_i32_1 = arith.constant 0 : i32
    return %c0_i32, %c0_i32_0 : i32, i32
  }
  func.func @transform_7(%arg0: i32) -> (i32, i32) {
    %c0_i32 = arith.constant 0 : i32
    %c0_i32_0 = arith.constant 0 : i32
    %c0_i32_1 = arith.constant 0 : i32
    return %c0_i32, %c0_i32_0 : i32, i32
  }
  func.func @transform_8(%arg0: i32) -> (i32, i32) {
    %c0_i32 = arith.constant 0 : i32
    %c0_i32_0 = arith.constant 0 : i32
    %c0_i32_1 = arith.constant 0 : i32
    return %c0_i32, %c0_i32_0 : i32, i32
  }
  func.func @transform_9(%arg0: i32) -> (i32, i32) {
    %c0_i32 = arith.constant 0 : i32
    %c0_i32_0 = arith.constant 0 : i32
    %c0_i32_1 = arith.constant 0 : i32
    return %c0_i32, %c0_i32_0 : i32, i32
  }
  func.func @transform_10(%arg0: i32) -> (i32, i32) {
    %c0_i32 = arith.constant 0 : i32
    %c0_i32_0 = arith.constant 0 : i32
    %c0_i32_1 = arith.constant 0 : i32
    return %c0_i32, %c0_i32_0 : i32, i32
  }
  func.func @transform_11(%arg0: i32) -> (i32, i32, i32) {
    %c0_i32 = arith.constant 0 : i32
    %c0_i32_0 = arith.constant 0 : i32
    %c0_i32_1 = arith.constant 0 : i32
    return %arg0, %c0_i32, %c0_i32_0 : i32, i32, i32
  }
}

</mosaic_0001>

<llo_original>
// kernel: tpu_custom_call.1
$region0: #{tpu_custom_call.1}
  #allocation0 [shape = 'u32[]', space=smem, size = 0x4, offset = 0x4, fixed_abs, tag = 'smem constant byte address 0x4 - core index']
  #allocation1 [shape = 'u32[72,128]{1,0:T(1,128)}', space=vmem, size = 0x9000, scoped, tag = 'internal scratch']
  %s0 = inlined_call_operand.hbm [shape: f32[2,8,32], index: 0, kind: input, shape index: {}]
  %s1 = inlined_call_operand.hbm [shape: f32[2,8,32], index: 1, kind: input, shape index: {}]
  %s2 = inlined_call_operand.hbm [shape: f32[2,8,32], index: 2, kind: input, shape index: {}]
  %s3 = inlined_call_operand.hbm [shape: f32[32,32], index: 3, kind: input, shape index: {}]
  %s4 = inlined_call_operand.vmem [shape: f32[1,32], index: 4, kind: input, shape index: {}]
  %s5 = inlined_call_operand.hbm [shape: f32[32,32], index: 5, kind: input, shape index: {}]
  %s6 = inlined_call_operand.vmem [shape: f32[1,32], index: 6, kind: input, shape index: {}]
  %s7 = inlined_call_operand.hbm [shape: f32[32,32], index: 7, kind: input, shape index: {}]
  %s8 = inlined_call_operand.vmem [shape: f32[1,32], index: 8, kind: input, shape index: {}]
  %s9 = inlined_call_operand.hbm [shape: f32[32,128], index: 9, kind: input, shape index: {}]
  %s10 = inlined_call_operand.vmem [shape: f32[1,128], index: 10, kind: input, shape index: {}]
  %s11 = inlined_call_operand.hbm [shape: f32[2,8,128], index: 11, kind: output, shape index: {}]
  %s12 = sld [smem:[#allocation0]]
  $region105: #{tpu_custom_call.1} parent=0
    _
  %s14 = ssub.s32 1, %s12
  %s15 = scalar_select 0, %s14, %s12
  $region1: #{tpu_custom_call.1} parent=0
    #allocation2 [shape = 'u8[8192]{0}', space=vmem, size = 0x2000, scoped, tag = 'input window, operand 0']
    #allocation3 [shape = 's32[2]{0}', space=sflag, size = 0x8, scoped, tag = 'scoped memory for tpu_custom_call.1']
    #allocation4 [shape = 's32[2]{0}', space=sflag, size = 0x8, scoped, tag = 'scoped memory for tpu_custom_call.1']
    #allocation5 [shape = 'u8[8192]{0}', space=vmem, size = 0x2000, scoped, tag = 'input window, operand 1']
    #allocation6 [shape = 's32[2]{0}', space=sflag, size = 0x8, scoped, tag = 'scoped memory for tpu_custom_call.1']
    #allocation7 [shape = 'u8[8192]{0}', space=vmem, size = 0x2000, scoped, tag = 'input window, operand 2']
    #allocation8 [shape = 'u8[16384]{0}', space=vmem, size = 0x4000, scoped, tag = 'input window, operand 3, single buffered']
    #allocation9 [shape = 's32[1]{0}', space=sflag, size = 0x4, scoped, tag = 'scoped memory for tpu_custom_call.1']
    #allocation10 [shape = 'u8[16384]{0}', space=vmem, size = 0x4000, scoped, tag = 'input window, operand 5, single buffered']
    #allocation11 [shape = 'u8[16384]{0}', space=vmem, size = 0x4000, scoped, tag = 'input window, operand 7, single buffered']
    #allocation12 [shape = 's32[1]{0}', space=sflag, size = 0x4, scoped, tag = 'scoped memory for tpu_custom_call.1']
    #allocation13 [shape = 'u8[16384]{0}', space=vmem, size = 0x4000, scoped, tag = 'input window, operand 9, single buffered']
    #allocation14 [shape = 'u8[8192]{0}', space=vmem, size = 0x2000, scoped, tag = 'output window, operand 0']
    %16 = vsyncpa [#allocation3], 0
    %s17 = scalar_lea.sflag [#allocation3], 1
    %18 = vsyncpa %s17, 0
    %19 = vsyncpa [#allocation6], 0
    %s20 = scalar_lea.sflag [#allocation6], 1
    %21 = vsyncpa %s20, 0
    %22 = vsyncpa [#allocation9], 0
    %23 = vsyncpa [#allocation12], 0
    %24 = vsyncpa [#allocation4], 0
    %s25 = scalar_lea.sflag [#allocation4], 1
    %26 = vsyncpa %s25, 0
    loop: start=0, step=1, limit=4
    $region2: #{tpu_custom_call.1} parent=1 // loop_pre_header
      _
    $region3: #{tpu_custom_call.1} parent=1 // loop_header
      %s28 = sphi 0, %s32
      %p29 = scmp.ge.s32.totalorder %s28, 4
      %s38 = sphi 0, %s40
      %s41 = sphi 0, %s38
      %s42 = sphi 0, %s41
      %s58 = sphi 0, %s42
      %s64 = sphi 0, %s66
      %s67 = sphi 0, %s64
      %s68 = sphi 0, %s67
      %s84 = sphi 0, %s68
      %s90 = sphi 0, %s92
      %s93 = sphi 0, %s90
      %s94 = sphi 0, %s93
      %s110 = sphi 0, %s94
      %s114 = sphi 0, %s114
      %s116 = sphi 0, %s114
      %s117 = sphi 0, %s116
      %s131 = sphi 0, %s117
      %s135 = sphi 0, %s135
      %s137 = sphi 0, %s135
      %s138 = sphi 0, %s137
      %s152 = sphi 0, %s138
      %s156 = sphi 0, %s156
      %s158 = sphi 0, %s156
      %s159 = sphi 0, %s158
      %s173 = sphi 0, %s159
      %s177 = sphi 0, %s177
      %s179 = sphi 0, %s177
      %s180 = sphi 0, %s179
      %s194 = sphi 0, %s180
      %s198 = sphi 0, %s198
      %s200 = sphi 0, %s198
      %s201 = sphi 0, %s200
      %s215 = sphi 0, %s201
      %s219 = sphi 0, %s219
      %s221 = sphi 0, %s219
      %s222 = sphi 0, %s221
      %s236 = sphi 0, %s222
      %s240 = sphi 0, %s240
      %s242 = sphi 0, %s240
      %s243 = sphi 0, %s242
      %s257 = sphi 0, %s243
      %s261 = sphi 0, %s261
      %s263 = sphi 0, %s261
      %s264 = sphi 0, %s263
      %s278 = sphi 0, %s264
      %s284 = sphi 0, %s286
      %s287 = sphi 0, %s284
      %s288 = sphi 0, %s287
      %s304 = sphi 0, %s288
    $region4: #{tpu_custom_call.1} parent=1 // loop_header_branch
      %31 = sbr.rel (%p29) target = $region8
    $region5: #{tpu_custom_call.1} parent=1 // loop_body
      %s33 = ssub.s32 %s28, 1
      %s34 = ssub.s32 %s28, 2
      %s35 = sadd.s32 %s28, 1
      %s36 = ssub.s32 %s28, %s35
      %p37 = scmp.eq.s32.totalorder %s36, 0
      %s39 = sadd.s32 %s38, 1
      %s40 = scalar_select %p37, %s38, %s39
      %p43 = pneg %p37
      %p44 = scmp.eq.s32.totalorder %s28, 1
      %p45 = por %p43, %p44
      %p46 = scmp.ne.s32.totalorder %s38, %s41
      %p47 = scmp.eq.s32.totalorder %s28, 0
      %p48 = por %p46, %p47
      %p49 = scmp.ne.s32.totalorder %s38, %s41
      %p50 = scmp.eq.s32.totalorder %s33, 1
      %p51 = por %p49, %p50
      %p52 = scmp.ne.s32.totalorder %s41, %s42
      %p53 = scmp.eq.s32.totalorder %s33, 0
      %p54 = por %p52, %p53
      %p55 = scmp.ne.s32.totalorder %s41, %s42
      %p56 = scmp.eq.s32.totalorder %s34, 1
      %p57 = por %p55, %p56
      %p59 = scmp.ne.s32.totalorder %s42, %s58
      %p60 = scmp.eq.s32.totalorder %s34, 0
      %p61 = por %p59, %p60
      %s62 = ssub.s32 %s28, %s35
      %p63 = scmp.eq.s32.totalorder %s62, 0
      %s65 = sadd.s32 %s64, 1
      %s66 = scalar_select %p63, %s64, %s65
      %p69 = pneg %p63
      %p70 = scmp.eq.s32.totalorder %s28, 1
      %p71 = por %p69, %p70
      %p72 = scmp.ne.s32.totalorder %s64, %s67
      %p73 = scmp.eq.s32.totalorder %s28, 0
      %p74 = por %p72, %p73
      %p75 = scmp.ne.s32.totalorder %s64, %s67
      %p76 = scmp.eq.s32.totalorder %s33, 1
      %p77 = por %p75, %p76
      %p78 = scmp.ne.s32.totalorder %s67, %s68
      %p79 = scmp.eq.s32.totalorder %s33, 0
      %p80 = por %p78, %p79
      %p81 = scmp.ne.s32.totalorder %s67, %s68
      %p82 = scmp.eq.s32.totalorder %s34, 1
      %p83 = por %p81, %p82
      %p85 = scmp.ne.s32.totalorder %s68, %s84
      %p86 = scmp.eq.s32.totalorder %s34, 0
      %p87 = por %p85, %p86
      %s88 = ssub.s32 %s28, %s35
      %p89 = scmp.eq.s32.totalorder %s88, 0
      %s91 = sadd.s32 %s90, 1
      %s92 = scalar_select %p89, %s90, %s91
      %p95 = pneg %p89
      %p96 = scmp.eq.s32.totalorder %s28, 1
      %p97 = por %p95, %p96
      %p98 = scmp.ne.s32.totalorder %s90, %s93
      %p99 = scmp.eq.s32.totalorder %s28, 0
      %p100 = por %p98, %p99
      %p101 = scmp.ne.s32.totalorder %s90, %s93
      %p102 = scmp.eq.s32.totalorder %s33, 1
      %p103 = por %p101, %p102
      %p104 = scmp.ne.s32.totalorder %s93, %s94
      %p105 = scmp.eq.s32.totalorder %s33, 0
      %p106 = por %p104, %p105
      %p107 = scmp.ne.s32.totalorder %s93, %s94
      %p108 = scmp.eq.s32.totalorder %s34, 1
      %p109 = por %p107, %p108
      %p111 = scmp.ne.s32.totalorder %s94, %s110
      %p112 = scmp.eq.s32.totalorder %s34, 0
      %p113 = por %p111, %p112
      %s115 = sadd.s32 %s114, 1
      %p118 = scmp.eq.s32.totalorder %s28, 1
      %p119 = scmp.ne.s32.totalorder %s114, %s116
      %p120 = scmp.eq.s32.totalorder %s28, 0
      %p121 = por %p119, %p120
      %p122 = scmp.ne.s32.totalorder %s114, %s116
      %p123 = scmp.eq.s32.totalorder %s33, 1
      %p124 = por %p122, %p123
      %p125 = scmp.ne.s32.totalorder %s116, %s117
      %p126 = scmp.eq.s32.totalorder %s33, 0
      %p127 = por %p125, %p126
      %p128 = scmp.ne.s32.totalorder %s116, %s117
      %p129 = scmp.eq.s32.totalorder %s34, 1
      %p130 = por %p128, %p129
      %p132 = scmp.ne.s32.totalorder %s117, %s131
      %p133 = scmp.eq.s32.totalorder %s34, 0
      %p134 = por %p132, %p133
      %s136 = sadd.s32 %s135, 1
      %p139 = scmp.eq.s32.totalorder %s28, 1
      %p140 = scmp.ne.s32.totalorder %s135, %s137
      %p141 = scmp.eq.s32.totalorder %s28, 0
      %p142 = por %p140, %p141
      %p143 = scmp.ne.s32.totalorder %s135, %s137
      %p144 = scmp.eq.s32.totalorder %s33, 1
      %p145 = por %p143, %p144
      %p146 = scmp.ne.s32.totalorder %s137, %s138
      %p147 = scmp.eq.s32.totalorder %s33, 0
      %p148 = por %p146, %p147
      %p149 = scmp.ne.s32.totalorder %s137, %s138
      %p150 = scmp.eq.s32.totalorder %s34, 1
      %p151 = por %p149, %p150
      %p153 = scmp.ne.s32.totalorder %s138, %s152
      %p154 = scmp.eq.s32.totalorder %s34, 0
      %p155 = por %p153, %p154
      %s157 = sadd.s32 %s156, 1
      %p160 = scmp.eq.s32.totalorder %s28, 1
      %p161 = scmp.ne.s32.totalorder %s156, %s158
      %p162 = scmp.eq.s32.totalorder %s28, 0
      %p163 = por %p161, %p162
      %p164 = scmp.ne.s32.totalorder %s156, %s158
      %p165 = scmp.eq.s32.totalorder %s33, 1
      %p166 = por %p164, %p165
      %p167 = scmp.ne.s32.totalorder %s158, %s159
      %p168 = scmp.eq.s32.totalorder %s33, 0
      %p169 = por %p167, %p168
      %p170 = scmp.ne.s32.totalorder %s158, %s159
      %p171 = scmp.eq.s32.totalorder %s34, 1
      %p172 = por %p170, %p171
      %p174 = scmp.ne.s32.totalorder %s159, %s173
      %p175 = scmp.eq.s32.totalorder %s34, 0
      %p176 = por %p174, %p175
      %s178 = sadd.s32 %s177, 1
      %p181 = scmp.eq.s32.totalorder %s28, 1
      %p182 = scmp.ne.s32.totalorder %s177, %s179
      %p183 = scmp.eq.s32.totalorder %s28, 0
      %p184 = por %p182, %p183
      %p185 = scmp.ne.s32.totalorder %s177, %s179
      %p186 = scmp.eq.s32.totalorder %s33, 1
      %p187 = por %p185, %p186
      %p188 = scmp.ne.s32.totalorder %s179, %s180
      %p189 = scmp.eq.s32.totalorder %s33, 0
      %p190 = por %p188, %p189
      %p191 = scmp.ne.s32.totalorder %s179, %s180
      %p192 = scmp.eq.s32.totalorder %s34, 1
      %p193 = por %p191, %p192
      %p195 = scmp.ne.s32.totalorder %s180, %s194
      %p196 = scmp.eq.s32.totalorder %s34, 0
      %p197 = por %p195, %p196
      %s199 = sadd.s32 %s198, 1
      %p202 = scmp.eq.s32.totalorder %s28, 1
      %p203 = scmp.ne.s32.totalorder %s198, %s200
      %p204 = scmp.eq.s32.totalorder %s28, 0
      %p205 = por %p203, %p204
      %p206 = scmp.ne.s32.totalorder %s198, %s200
      %p207 = scmp.eq.s32.totalorder %s33, 1
      %p208 = por %p206, %p207
      %p209 = scmp.ne.s32.totalorder %s200, %s201
      %p210 = scmp.eq.s32.totalorder %s33, 0
      %p211 = por %p209, %p210
      %p212 = scmp.ne.s32.totalorder %s200, %s201
      %p213 = scmp.eq.s32.totalorder %s34, 1
      %p214 = por %p212, %p213
      %p216 = scmp.ne.s32.totalorder %s201, %s215
      %p217 = scmp.eq.s32.totalorder %s34, 0
      %p218 = por %p216, %p217
      %s220 = sadd.s32 %s219, 1
      %p223 = scmp.eq.s32.totalorder %s28, 1
      %p224 = scmp.ne.s32.totalorder %s219, %s221
      %p225 = scmp.eq.s32.totalorder %s28, 0
      %p226 = por %p224, %p225
      %p227 = scmp.ne.s32.totalorder %s219, %s221
      %p228 = scmp.eq.s32.totalorder %s33, 1
      %p229 = por %p227, %p228
      %p230 = scmp.ne.s32.totalorder %s221, %s222
      %p231 = scmp.eq.s32.totalorder %s33, 0
      %p232 = por %p230, %p231
      %p233 = scmp.ne.s32.totalorder %s221, %s222
      %p234 = scmp.eq.s32.totalorder %s34, 1
      %p235 = por %p233, %p234
      %p237 = scmp.ne.s32.totalorder %s222, %s236
      %p238 = scmp.eq.s32.totalorder %s34, 0
      %p239 = por %p237, %p238
      %s241 = sadd.s32 %s240, 1
      %p244 = scmp.eq.s32.totalorder %s28, 1
      %p245 = scmp.ne.s32.totalorder %s240, %s242
      %p246 = scmp.eq.s32.totalorder %s28, 0
      %p247 = por %p245, %p246
      %p248 = scmp.ne.s32.totalorder %s240, %s242
      %p249 = scmp.eq.s32.totalorder %s33, 1
      %p250 = por %p248, %p249
      %p251 = scmp.ne.s32.totalorder %s242, %s243
      %p252 = scmp.eq.s32.totalorder %s33, 0
      %p253 = por %p251, %p252
      %p254 = scmp.ne.s32.totalorder %s242, %s243
      %p255 = scmp.eq.s32.totalorder %s34, 1
      %p256 = por %p254, %p255
      %p258 = scmp.ne.s32.totalorder %s243, %s257
      %p259 = scmp.eq.s32.totalorder %s34, 0
      %p260 = por %p258, %p259
      %s262 = sadd.s32 %s261, 1
      %p265 = scmp.eq.s32.totalorder %s28, 1
      %p266 = scmp.ne.s32.totalorder %s261, %s263
      %p267 = scmp.eq.s32.totalorder %s28, 0
      %p268 = por %p266, %p267
      %p269 = scmp.ne.s32.totalorder %s261, %s263
      %p270 = scmp.eq.s32.totalorder %s33, 1
      %p271 = por %p269, %p270
      %p272 = scmp.ne.s32.totalorder %s263, %s264
      %p273 = scmp.eq.s32.totalorder %s33, 0
      %p274 = por %p272, %p273
      %p275 = scmp.ne.s32.totalorder %s263, %s264
      %p276 = scmp.eq.s32.totalorder %s34, 1
      %p277 = por %p275, %p276
      %p279 = scmp.ne.s32.totalorder %s264, %s278
      %p280 = scmp.eq.s32.totalorder %s34, 0
      %p281 = por %p279, %p280
      %s282 = ssub.s32 %s28, %s35
      %p283 = scmp.eq.s32.totalorder %s282, 0
      %s285 = sadd.s32 %s284, 1
      %s286 = scalar_select %p283, %s284, %s285
      %p289 = pneg %p283
      %p290 = scmp.eq.s32.totalorder %s28, 1
      %p291 = por %p289, %p290
      %p292 = scmp.ne.s32.totalorder %s284, %s287
      %p293 = scmp.eq.s32.totalorder %s28, 0
      %p294 = por %p292, %p293
      %p295 = scmp.ne.s32.totalorder %s284, %s287
      %p296 = scmp.eq.s32.totalorder %s33, 1
      %p297 = por %p295, %p296
      %p298 = scmp.ne.s32.totalorder %s287, %s288
      %p299 = scmp.eq.s32.totalorder %s33, 0
      %p300 = por %p298, %p299
      %p301 = scmp.ne.s32.totalorder %s287, %s288
      %p302 = scmp.eq.s32.totalorder %s34, 1
      %p303 = por %p301, %p302
      %p305 = scmp.ne.s32.totalorder %s288, %s304
      %p306 = scmp.eq.s32.totalorder %s34, 0
      %p307 = por %p305, %p306
      %p308 = scmp.le.s32.totalorder 1, %s28
      %p309 = scmp.lt.s32.totalorder %s28, 3
      %p310 = pnand %p308, %p309
      %p311 = pneg %p310
      // Predicated region
      $region9: #{tpu_custom_call.1} parent=5 // pred_check
        _
      $region10: #{tpu_custom_call.1} parent=5 // pred_check_branch
        %313 = sbr.rel (%p310) target = $region12
      $region11: #{tpu_custom_call.1} parent=5 // pred_region
        %s314 = ssub.s32 %s28, 1
        // Predicated region
        $region13: #{tpu_custom_call.1} parent=11 // pred_check
          %p315 = pneg %p127
        $region14: #{tpu_custom_call.1} parent=11 // pred_check_branch
          %317 = sbr.rel (%p315) target = $region16
        $region15: #{tpu_custom_call.1} parent=11 // pred_region
          %319 = vsyncadd [#allocation9], 0
          %s320 = sshll.u32 %s3, 4
          %s321 = int_to_ptr.hbm [resolvable:$true] %s320
          %s322 = sshll.u32 [#allocation8], 4
          %s323 = int_to_ptr.vmem [resolvable:$true] %s322
          %328 = dma.hbm_to_vmem [thread:$0]  %s321, 512, %s323, [#allocation9], 128, 128, 8
        $region16: #{tpu_custom_call.1} parent=11 // pred_fallthru
          _
        // Predicated region
        $region17: #{tpu_custom_call.1} parent=11 // pred_check
          %p329 = pneg %p148
        $region18: #{tpu_custom_call.1} parent=11 // pred_check_branch
          %331 = sbr.rel (%p329) target = $region20
        $region19: #{tpu_custom_call.1} parent=11 // pred_region
          _
        $region20: #{tpu_custom_call.1} parent=11 // pred_fallthru
          _
        // Predicated region
        $region21: #{tpu_custom_call.1} parent=11 // pred_check
          %p332 = pneg %p169
        $region22: #{tpu_custom_call.1} parent=11 // pred_check_branch
          %334 = sbr.rel (%p332) target = $region24
        $region23: #{tpu_custom_call.1} parent=11 // pred_region
          %336 = vsyncadd [#allocation9], 0
          %s337 = sshll.u32 %s5, 4
          %s338 = int_to_ptr.hbm [resolvable:$true] %s337
          %s339 = sshll.u32 [#allocation10], 4
          %s340 = int_to_ptr.vmem [resolvable:$true] %s339
          %345 = dma.hbm_to_vmem [thread:$0]  %s338, 512, %s340, [#allocation9], 128, 128, 8
        $region24: #{tpu_custom_call.1} parent=11 // pred_fallthru
          _
        // Predicated region
        $region25: #{tpu_custom_call.1} parent=11 // pred_check
          %p346 = pneg %p190
        $region26: #{tpu_custom_call.1} parent=11 // pred_check_branch
          %348 = sbr.rel (%p346) target = $region28
        $region27: #{tpu_custom_call.1} parent=11 // pred_region
          _
        $region28: #{tpu_custom_call.1} parent=11 // pred_fallthru
          _
        // Predicated region
        $region29: #{tpu_custom_call.1} parent=11 // pred_check
          %p349 = pneg %p211
        $region30: #{tpu_custom_call.1} parent=11 // pred_check_branch
          %351 = sbr.rel (%p349) target = $region32
        $region31: #{tpu_custom_call.1} parent=11 // pred_region
          %353 = vsyncadd [#allocation12], 0
          %s354 = sshll.u32 %s7, 4
          %s355 = int_to_ptr.hbm [resolvable:$true] %s354
          %s356 = sshll.u32 [#allocation11], 4
          %s357 = int_to_ptr.vmem [resolvable:$true] %s356
          %362 = dma.hbm_to_vmem [thread:$0]  %s355, 512, %s357, [#allocation12], 128, 128, 8
        $region32: #{tpu_custom_call.1} parent=11 // pred_fallthru
          _
        // Predicated region
        $region33: #{tpu_custom_call.1} parent=11 // pred_check
          %p363 = pneg %p232
        $region34: #{tpu_custom_call.1} parent=11 // pred_check_branch
          %365 = sbr.rel (%p363) target = $region36
        $region35: #{tpu_custom_call.1} parent=11 // pred_region
          _
        $region36: #{tpu_custom_call.1} parent=11 // pred_fallthru
          _
        // Predicated region
        $region37: #{tpu_custom_call.1} parent=11 // pred_check
          %p366 = pneg %p253
        $region38: #{tpu_custom_call.1} parent=11 // pred_check_branch
          %368 = sbr.rel (%p366) target = $region40
        $region39: #{tpu_custom_call.1} parent=11 // pred_region
          %370 = vsyncadd [#allocation12], 0
          %s371 = sshll.u32 %s9, 4
          %s372 = int_to_ptr.hbm [resolvable:$true] %s371
          %s373 = sshll.u32 [#allocation13], 4
          %s374 = int_to_ptr.vmem [resolvable:$true] %s373
          %379 = dma.hbm_to_vmem [thread:$0]  %s372, 512, %s374, [#allocation12], 128, 128, 8
        $region40: #{tpu_custom_call.1} parent=11 // pred_fallthru
          _
        // Predicated region
        $region41: #{tpu_custom_call.1} parent=11 // pred_check
          %p380 = pneg %p274
        $region42: #{tpu_custom_call.1} parent=11 // pred_check_branch
          %382 = sbr.rel (%p380) target = $region44
        $region43: #{tpu_custom_call.1} parent=11 // pred_region
          _
        $region44: #{tpu_custom_call.1} parent=11 // pred_fallthru
          _
      $region12: #{tpu_custom_call.1} parent=5 // pred_fallthru
        _
      %p383 = scmp.lt.s32.totalorder %s28, 2
      // Predicated region
      $region45: #{tpu_custom_call.1} parent=5 // pred_check
        %p384 = pneg %p383
      $region46: #{tpu_custom_call.1} parent=5 // pred_check_branch
        %386 = sbr.rel (%p384) target = $region48
      $region47: #{tpu_custom_call.1} parent=5 // pred_region
        // Predicated region
        $region49: #{tpu_custom_call.1} parent=47 // pred_check
          %p387 = pneg %p48
        $region50: #{tpu_custom_call.1} parent=47 // pred_check_branch
          %389 = sbr.rel (%p387) target = $region52
        $region51: #{tpu_custom_call.1} parent=47 // pred_region
          %s390 = sand.u32 %s38, 1
          %s391 = scalar_lea.sflag [#allocation3], %s390
          %s392 = sand.u32 %s38, 1
          %s393 = smul.addr %s392, 8
          %s394 = scalar_lea.vmem [#allocation2], %s393
          %396 = vsyncadd %s391, 0
          %s397 = smul.addr %s28, 8
          %s398 = scalar_lea.hbm %s0, %s397
          %s400 = sshll.u32 %s398, 4
          %s401 = int_to_ptr.hbm [resolvable:$true] %s400
          %s402 = sshll.u32 %s394, 4
          %s403 = int_to_ptr.vmem [resolvable:$true] %s402
          %405 = dma.hbm_to_vmem [thread:$0]  %s401, 128, %s403, %s391
        $region52: #{tpu_custom_call.1} parent=47 // pred_fallthru
          _
        // Predicated region
        $region53: #{tpu_custom_call.1} parent=47 // pred_check
          %p406 = pneg %p74
        $region54: #{tpu_custom_call.1} parent=47 // pred_check_branch
          %408 = sbr.rel (%p406) target = $region56
        $region55: #{tpu_custom_call.1} parent=47 // pred_region
          %s409 = sand.u32 %s28, 1
          %s410 = scalar_lea.sflag [#allocation6], %s409
          %s411 = sand.u32 %s64, 1
          %s412 = smul.addr %s411, 8
          %s413 = scalar_lea.vmem [#allocation5], %s412
          %415 = vsyncadd %s410, 0
          %s416 = smul.addr %s28, 8
          %s417 = scalar_lea.hbm %s1, %s416
          %s419 = sshll.u32 %s417, 4
          %s420 = int_to_ptr.hbm [resolvable:$true] %s419
          %s421 = sshll.u32 %s413, 4
          %s422 = int_to_ptr.vmem [resolvable:$true] %s421
          %424 = dma.hbm_to_vmem [thread:$0]  %s420, 128, %s422, %s410
        $region56: #{tpu_custom_call.1} parent=47 // pred_fallthru
          _
        // Predicated region
        $region57: #{tpu_custom_call.1} parent=47 // pred_check
          %p425 = pneg %p100
        $region58: #{tpu_custom_call.1} parent=47 // pred_check_branch
          %427 = sbr.rel (%p425) target = $region60
        $region59: #{tpu_custom_call.1} parent=47 // pred_region
          %s428 = sand.u32 %s28, 1
          %s429 = scalar_lea.sflag [#allocation6], %s428
          %s430 = sand.u32 %s90, 1
          %s431 = smul.addr %s430, 8
          %s432 = scalar_lea.vmem [#allocation7], %s431
          %434 = vsyncadd %s429, 0
          %s435 = smul.addr %s28, 8
          %s436 = scalar_lea.hbm %s2, %s435
          %s438 = sshll.u32 %s436, 4
          %s439 = int_to_ptr.hbm [resolvable:$true] %s438
          %s440 = sshll.u32 %s432, 4
          %s441 = int_to_ptr.vmem [resolvable:$true] %s440
          %443 = dma.hbm_to_vmem [thread:$0]  %s439, 128, %s441, %s429
        $region60: #{tpu_custom_call.1} parent=47 // pred_fallthru
          _
      $region48: #{tpu_custom_call.1} parent=5 // pred_fallthru
        _
      %p444 = scmp.le.s32.totalorder 1, %s28
      %p445 = scmp.lt.s32.totalorder %s28, 3
      %p446 = pnand %p444, %p445
      %p447 = pneg %p446
      // Predicated region
      $region61: #{tpu_custom_call.1} parent=5 // pred_check
        _
      $region62: #{tpu_custom_call.1} parent=5 // pred_check_branch
        %449 = sbr.rel (%p446) target = $region64
      $region63: #{tpu_custom_call.1} parent=5 // pred_region
        %s450 = ssub.s32 %s28, 1
        %s451 = sand.u32 %s41, 1
        %s452 = scalar_lea.sflag [#allocation3], %s451
        %s453 = sand.u32 %s41, 1
        %s454 = smul.addr %s453, 8
        %s455 = scalar_lea.vmem [#allocation2], %s454
        // Predicated region
        $region65: #{tpu_custom_call.1} parent=63 // pred_check
          %p456 = pneg %p54
        $region66: #{tpu_custom_call.1} parent=63 // pred_check_branch
          %458 = sbr.rel (%p456) target = $region68
        $region67: #{tpu_custom_call.1} parent=63 // pred_region
          %460 = dma.done %s452, 128
        $region68: #{tpu_custom_call.1} parent=63 // pred_fallthru
          _
        %s461 = sand.u32 %s33, 1
        %s462 = scalar_lea.sflag [#allocation6], %s461
        %s463 = sand.u32 %s67, 1
        %s464 = smul.addr %s463, 8
        %s465 = scalar_lea.vmem [#allocation5], %s464
        // Predicated region
        $region69: #{tpu_custom_call.1} parent=63 // pred_check
          %p466 = pneg %p80
        $region70: #{tpu_custom_call.1} parent=63 // pred_check_branch
          %468 = sbr.rel (%p466) target = $region72
        $region71: #{tpu_custom_call.1} parent=63 // pred_region
          %470 = dma.done %s462, 128
        $region72: #{tpu_custom_call.1} parent=63 // pred_fallthru
          _
        %s471 = sand.u32 %s33, 1
        %s472 = scalar_lea.sflag [#allocation6], %s471
        %s473 = sand.u32 %s93, 1
        %s474 = smul.addr %s473, 8
        %s475 = scalar_lea.vmem [#allocation7], %s474
        // Predicated region
        $region73: #{tpu_custom_call.1} parent=63 // pred_check
          %p476 = pneg %p106
        $region74: #{tpu_custom_call.1} parent=63 // pred_check_branch
          %478 = sbr.rel (%p476) target = $region76
        $region75: #{tpu_custom_call.1} parent=63 // pred_region
          %480 = dma.done %s472, 128
        $region76: #{tpu_custom_call.1} parent=63 // pred_fallthru
          _
        // Predicated region
        $region77: #{tpu_custom_call.1} parent=63 // pred_check
          %p481 = pneg %p127
        $region78: #{tpu_custom_call.1} parent=63 // pred_check_branch
          %483 = sbr.rel (%p481) target = $region80
        $region79: #{tpu_custom_call.1} parent=63 // pred_region
          %485 = dma.done [#allocation9], 512
        $region80: #{tpu_custom_call.1} parent=63 // pred_fallthru
          _
        // Predicated region
        $region81: #{tpu_custom_call.1} parent=63 // pred_check
          %p486 = pneg %p169
        $region82: #{tpu_custom_call.1} parent=63 // pred_check_branch
          %488 = sbr.rel (%p486) target = $region84
        $region83: #{tpu_custom_call.1} parent=63 // pred_region
          %490 = dma.done [#allocation9], 512
        $region84: #{tpu_custom_call.1} parent=63 // pred_fallthru
          _
        // Predicated region
        $region85: #{tpu_custom_call.1} parent=63 // pred_check
          %p491 = pneg %p211
        $region86: #{tpu_custom_call.1} parent=63 // pred_check_branch
          %493 = sbr.rel (%p491) target = $region88
        $region87: #{tpu_custom_call.1} parent=63 // pred_region
          %495 = dma.done [#allocation12], 512
        $region88: #{tpu_custom_call.1} parent=63 // pred_fallthru
          _
        // Predicated region
        $region89: #{tpu_custom_call.1} parent=63 // pred_check
          %p496 = pneg %p253
        $region90: #{tpu_custom_call.1} parent=63 // pred_check_branch
          %498 = sbr.rel (%p496) target = $region92
        $region91: #{tpu_custom_call.1} parent=63 // pred_region
          %500 = dma.done [#allocation12], 512
        $region92: #{tpu_custom_call.1} parent=63 // pred_fallthru
          _
        %s501 = sand.u32 %s41, 1
        %s502 = scalar_lea.sflag [#allocation3], %s501
        %s503 = sand.u32 %s41, 1
        %s504 = smul.addr %s503, 8
        %s505 = scalar_lea.vmem [#allocation2], %s504
        %p506 = pneg %p54
        %p507 = pneg %p51
        %s508 = sand.u32 %s33, 1
        %s509 = scalar_lea.sflag [#allocation6], %s508
        %s510 = sand.u32 %s67, 1
        %s511 = smul.addr %s510, 8
        %s512 = scalar_lea.vmem [#allocation5], %s511
        %p513 = pneg %p80
        %p514 = pneg %p77
        %s515 = sand.u32 %s33, 1
        %s516 = scalar_lea.sflag [#allocation6], %s515
        %s517 = sand.u32 %s93, 1
        %s518 = smul.addr %s517, 8
        %s519 = scalar_lea.vmem [#allocation7], %s518
        %p520 = pneg %p106
        %p521 = pneg %p103
        %p522 = pneg %p127
        %p523 = pneg %p124
        %p524 = pneg %p148
        %p525 = pneg %p145
        %p526 = pneg %p169
        %p527 = pneg %p166
        %p528 = pneg %p190
        %p529 = pneg %p187
        %p530 = pneg %p211
        %p531 = pneg %p208
        %p532 = pneg %p232
        %p533 = pneg %p229
        %p534 = pneg %p253
        %p535 = pneg %p250
        %p536 = pneg %p274
        %p537 = pneg %p271
        %p538 = pneg %p300
        %p539 = pneg %p297
        %s540 = sand.u32 %s287, 1
        %s541 = scalar_lea.sflag [#allocation4], %s540
        %s542 = sand.u32 %s287, 1
        %s543 = smul.addr %s542, 8
        %s544 = scalar_lea.vmem [#allocation14], %s543
        %v545 = vld [vmem:[%s455] sm:$0xff]
        %v546 = vld [vmem:[%s465] sm:$0xff]
        %v547 = vld [vmem:[%s475] sm:$0xff]
        %v548 = vld [vmem:[#allocation8] sm:$0xff]
        %v549 = vld [vmem:[#allocation8 + $0x8] sm:$0xff]
        %v550 = vld [vmem:[#allocation8 + $0x10] sm:$0xff]
        %v551 = vld [vmem:[#allocation8 + $0x18] sm:$0xff]
        %v552 = vld [vmem:[%s4] sm:$0x1]
        %v554 = vperm.slane %v552, 0
        %vm556 = vcmask 261120
        %v558 = vsel %vm556, %v545, 0
        %560 = vmatpush.msra.mxu0 0.0
        %561 = vmatpush.msra.mxu0 0.0
        %562 = vmatpush.msra.mxu0 0.0
        %563 = vmatpush.msra.mxu0 0.0
        %564 = vmatpush.msra.mxu0 0.0
        %565 = vmatpush.msra.mxu0 0.0
        %566 = vmatpush.msra.mxu0 0.0
        %567 = vmatpush.msra.mxu0 0.0
        %568 = vmatpush.msra.mxu0 0.0
        %569 = vmatpush.msra.mxu0 0.0
        %570 = vmatpush.msra.mxu0 0.0
        %571 = vmatpush.msra.mxu0 0.0
        %572 = vmatpush.msra.mxu0 %v551
        %573 = vmatpush.msra.mxu0 %v550
        %574 = vmatpush.msra.mxu0 %v549
        %575 = vmatpush.msra.mxu0 %v548
        %576 = vmatmul.f32.gmra.mxu0 %v558
        %v577 = vpop.f32.mrf.mxu0
        %v578 = vadd.f32 %v554, %v577
        %579 = vdwg.mxu0
        %v580 = vld [vmem:[#allocation10] sm:$0xff]
        %v581 = vld [vmem:[#allocation10 + $0x8] sm:$0xff]
        %v582 = vld [vmem:[#allocation10 + $0x10] sm:$0xff]
        %v583 = vld [vmem:[#allocation10 + $0x18] sm:$0xff]
        %v584 = vld [vmem:[%s6] sm:$0x1]
        %v586 = vperm.slane %v584, 0
        %v589 = vsel %vm556, %v546, 0
        %591 = vmatpush.msra.mxu0 0.0
        %592 = vmatpush.msra.mxu0 0.0
        %593 = vmatpush.msra.mxu0 0.0
        %594 = vmatpush.msra.mxu0 0.0
        %595 = vmatpush.msra.mxu0 0.0
        %596 = vmatpush.msra.mxu0 0.0
        %597 = vmatpush.msra.mxu0 0.0
        %598 = vmatpush.msra.mxu0 0.0
        %599 = vmatpush.msra.mxu0 0.0
        %600 = vmatpush.msra.mxu0 0.0
        %601 = vmatpush.msra.mxu0 0.0
        %602 = vmatpush.msra.mxu0 0.0
        %603 = vmatpush.msra.mxu0 %v583
        %604 = vmatpush.msra.mxu0 %v582
        %605 = vmatpush.msra.mxu0 %v581
        %606 = vmatpush.msra.mxu0 %v580
        %607 = vmatmul.f32.gmra.mxu0 %v589
        %v608 = vpop.f32.mrf.mxu0
        %v609 = vadd.f32 %v586, %v608
        %610 = vdwg.mxu0
        %v611 = vld [vmem:[#allocation11] sm:$0xff]
        %v612 = vld [vmem:[#allocation11 + $0x8] sm:$0xff]
        %v613 = vld [vmem:[#allocation11 + $0x10] sm:$0xff]
        %v614 = vld [vmem:[#allocation11 + $0x18] sm:$0xff]
        %v615 = vld [vmem:[%s8] sm:$0x1]
        %v617 = vperm.slane %v615, 0
        %v620 = vsel %vm556, %v547, 0
        %622 = vmatpush.msra.mxu0 0.0
        %623 = vmatpush.msra.mxu0 0.0
        %624 = vmatpush.msra.mxu0 0.0
        %625 = vmatpush.msra.mxu0 0.0
        %626 = vmatpush.msra.mxu0 0.0
        %627 = vmatpush.msra.mxu0 0.0
        %628 = vmatpush.msra.mxu0 0.0
        %629 = vmatpush.msra.mxu0 0.0
        %630 = vmatpush.msra.mxu0 0.0
        %631 = vmatpush.msra.mxu0 0.0
        %632 = vmatpush.msra.mxu0 0.0
        %633 = vmatpush.msra.mxu0 0.0
        %634 = vmatpush.msra.mxu0 %v614
        %635 = vmatpush.msra.mxu0 %v613
        %636 = vmatpush.msra.mxu0 %v612
        %637 = vmatpush.msra.mxu0 %v611
        %638 = vmatmul.f32.gmra.mxu0 %v620
        %v639 = vpop.f32.mrf.mxu0
        %v640 = vadd.f32 %v617, %v639
        %641 = vdwg.mxu0
        %vm642 = vcmask 64512
        %v644 = vsel %vm642, %v578, 0
        %v647 = vsel %vm642, %v609, 0
        %649 = vmatpush.xpose.msra.mxu0 0.0
        %650 = vmatpush.xpose.msra.mxu0 0.0
        %651 = vmatpush.xpose.msra.mxu0 0.0
        %652 = vmatpush.xpose.msra.mxu0 0.0
        %653 = vmatpush.xpose.msra.mxu0 0.0
        %654 = vmatpush.xpose.msra.mxu0 0.0
        %655 = vmatpush.xpose.msra.mxu0 0.0
        %656 = vmatpush.xpose.msra.mxu0 0.0
        %657 = vmatpush.xpose.msra.mxu0 0.0
        %658 = vmatpush.xpose.msra.mxu0 0.0
        %659 = vmatpush.xpose.msra.mxu0 0.0
        %660 = vmatpush.xpose.msra.mxu0 0.0
        %661 = vmatpush.xpose.msra.mxu0 0.0
        %662 = vmatpush.xpose.msra.mxu0 0.0
        %663 = vmatpush.xpose.msra.mxu0 0.0
        %664 = vmatpush.xpose.msra.mxu0 %v647
        %665 = vmatmul.f32.gmra.mxu0 %v644
        %v666 = vpop.f32.mrf.mxu0
        %v667 = vadd.f32 0.0, %v666
        %668 = vdwg.mxu0
        %v669 = vsel %vm642, %v667, -inf
        %v670 = vrot.slane %v669, 4
        %v671 = vmax.f32 %v669, %v670
        %v672 = vrot.slane %v671, 2
        %v673 = vmax.f32 %v671, %v672
        %v674 = vrot.slane %v673, 1
        %v675 = vmax.f32 %v673, %v674
        %v676 = vsub.f32 %v667, %v675
        %v677 = vmul.f32 %v676, 1.442695
        %v678 = vpow.pop %v677
        %v679 = vsel %vm642, %v678, 0.0
        %v680 = vrot.slane %v679, 4
        %v681 = vadd.f32 %v679, %v680
        %v682 = vrot.slane %v681, 2
        %v683 = vadd.f32 %v681, %v682
        %v684 = vrot.slane %v683, 1
        %v685 = vadd.f32 %v683, %v684
        %v686 = vrcp.pop %v685
        %v687 = vmul.f32 %v678, %v686
        %v689 = vsel %vm642, %v687, 0
        %691 = vmatpush.msra.mxu0 0.0
        %692 = vmatpush.msra.mxu0 0.0
        %693 = vmatpush.msra.mxu0 0.0
        %694 = vmatpush.msra.mxu0 0.0
        %695 = vmatpush.msra.mxu0 0.0
        %696 = vmatpush.msra.mxu0 0.0
        %697 = vmatpush.msra.mxu0 0.0
        %698 = vmatpush.msra.mxu0 0.0
        %699 = vmatpush.msra.mxu0 0.0
        %700 = vmatpush.msra.mxu0 0.0
        %701 = vmatpush.msra.mxu0 0.0
        %702 = vmatpush.msra.mxu0 0.0
        %703 = vmatpush.msra.mxu0 0.0
        %704 = vmatpush.msra.mxu0 0.0
        %705 = vmatpush.msra.mxu0 0.0
        %706 = vmatpush.msra.mxu0 %v640
        %707 = vmatmul.f32.gmra.mxu0 %v689
        %v708 = vpop.f32.mrf.mxu0
        %v709 = vadd.f32 0.0, %v708
        %710 = vdwg.mxu0
        %711 = vrot.lane.b32.xlu0 %v578, 120
        %v712 = vpop.permute.xlu0 %711
        %713 = vrot.lane.b32.xlu0 %v609, 120
        %v714 = vpop.permute.xlu0 %713
        %v715 = vsel %vm642, %v712, 0
        %v717 = vsel %vm642, %v714, 0
        %719 = vmatpush.xpose.msra.mxu0 0.0
        %720 = vmatpush.xpose.msra.mxu0 0.0
        %721 = vmatpush.xpose.msra.mxu0 0.0
        %722 = vmatpush.xpose.msra.mxu0 0.0
        %723 = vmatpush.xpose.msra.mxu0 0.0
        %724 = vmatpush.xpose.msra.mxu0 0.0
        %725 = vmatpush.xpose.msra.mxu0 0.0
        %726 = vmatpush.xpose.msra.mxu0 0.0
        %727 = vmatpush.xpose.msra.mxu0 0.0
        %728 = vmatpush.xpose.msra.mxu0 0.0
        %729 = vmatpush.xpose.msra.mxu0 0.0
        %730 = vmatpush.xpose.msra.mxu0 0.0
        %731 = vmatpush.xpose.msra.mxu0 0.0
        %732 = vmatpush.xpose.msra.mxu0 0.0
        %733 = vmatpush.xpose.msra.mxu0 0.0
        %734 = vmatpush.xpose.msra.mxu0 %v717
        %735 = vmatmul.f32.gmra.mxu0 %v715
        %v736 = vpop.f32.mrf.mxu0
        %v737 = vadd.f32 0.0, %v736
        %738 = vdwg.mxu0
        %v739 = vsel %vm642, %v737, -inf
        %v740 = vrot.slane %v739, 4
        %v741 = vmax.f32 %v739, %v740
        %v742 = vrot.slane %v741, 2
        %v743 = vmax.f32 %v741, %v742
        %v744 = vrot.slane %v743, 1
        %v745 = vmax.f32 %v743, %v744
        %v746 = vsub.f32 %v737, %v745
        %v747 = vmul.f32 %v746, 1.442695
        %v748 = vpow.pop %v747
        %v749 = vsel %vm642, %v748, 0.0
        %v750 = vrot.slane %v749, 4
        %v751 = vadd.f32 %v749, %v750
        %v752 = vrot.slane %v751, 2
        %v753 = vadd.f32 %v751, %v752
        %v754 = vrot.slane %v753, 1
        %v755 = vadd.f32 %v753, %v754
        %v756 = vrcp.pop %v755
        %v757 = vmul.f32 %v748, %v756
        %759 = vrot.lane.b32.xlu0 %v640, 120
        %v760 = vpop.permute.xlu0 %759
        %v763 = vsel %vm642, %v757, 0
        %765 = vmatpush.msra.mxu0 0.0
        %766 = vmatpush.msra.mxu0 0.0
        %767 = vmatpush.msra.mxu0 0.0
        %768 = vmatpush.msra.mxu0 0.0
        %769 = vmatpush.msra.mxu0 0.0
        %770 = vmatpush.msra.mxu0 0.0
        %771 = vmatpush.msra.mxu0 0.0
        %772 = vmatpush.msra.mxu0 0.0
        %773 = vmatpush.msra.mxu0 0.0
        %774 = vmatpush.msra.mxu0 0.0
        %775 = vmatpush.msra.mxu0 0.0
        %776 = vmatpush.msra.mxu0 0.0
        %777 = vmatpush.msra.mxu0 0.0
        %778 = vmatpush.msra.mxu0 0.0
        %779 = vmatpush.msra.mxu0 0.0
        %780 = vmatpush.msra.mxu0 %v760
        %781 = vmatmul.f32.gmra.mxu0 %v763
        %v782 = vpop.f32.mrf.mxu0
        %v783 = vadd.f32 0.0, %v782
        %784 = vdwg.mxu0
        %785 = vrot.lane.b32.xlu0 %v578, 112
        %v786 = vpop.permute.xlu0 %785
        %787 = vrot.lane.b32.xlu0 %v609, 112
        %v788 = vpop.permute.xlu0 %787
        %v789 = vsel %vm642, %v786, 0
        %v791 = vsel %vm642, %v788, 0
        %793 = vmatpush.xpose.msra.mxu0 0.0
        %794 = vmatpush.xpose.msra.mxu0 0.0
        %795 = vmatpush.xpose.msra.mxu0 0.0
        %796 = vmatpush.xpose.msra.mxu0 0.0
        %797 = vmatpush.xpose.msra.mxu0 0.0
        %798 = vmatpush.xpose.msra.mxu0 0.0
        %799 = vmatpush.xpose.msra.mxu0 0.0
        %800 = vmatpush.xpose.msra.mxu0 0.0
        %801 = vmatpush.xpose.msra.mxu0 0.0
        %802 = vmatpush.xpose.msra.mxu0 0.0
        %803 = vmatpush.xpose.msra.mxu0 0.0
        %804 = vmatpush.xpose.msra.mxu0 0.0
        %805 = vmatpush.xpose.msra.mxu0 0.0
        %806 = vmatpush.xpose.msra.mxu0 0.0
        %807 = vmatpush.xpose.msra.mxu0 0.0
        %808 = vmatpush.xpose.msra.mxu0 %v791
        %809 = vmatmul.f32.gmra.mxu0 %v789
        %v810 = vpop.f32.mrf.mxu0
        %v811 = vadd.f32 0.0, %v810
        %812 = vdwg.mxu0
        %v813 = vsel %vm642, %v811, -inf
        %v814 = vrot.slane %v813, 4
        %v815 = vmax.f32 %v813, %v814
        %v816 = vrot.slane %v815, 2
        %v817 = vmax.f32 %v815, %v816
        %v818 = vrot.slane %v817, 1
        %v819 = vmax.f32 %v817, %v818
        %v820 = vsub.f32 %v811, %v819
        %v821 = vmul.f32 %v820, 1.442695
        %v822 = vpow.pop %v821
        %v823 = vsel %vm642, %v822, 0.0
        %v824 = vrot.slane %v823, 4
        %v825 = vadd.f32 %v823, %v824
        %v826 = vrot.slane %v825, 2
        %v827 = vadd.f32 %v825, %v826
        %v828 = vrot.slane %v827, 1
        %v829 = vadd.f32 %v827, %v828
        %v830 = vrcp.pop %v829
        %v831 = vmul.f32 %v822, %v830
        %832 = vrot.lane.b32.xlu0 %v640, 112
        %v833 = vpop.permute.xlu0 %832
        %v836 = vsel %vm642, %v831, 0
        %838 = vmatpush.msra.mxu0 0.0
        %839 = vmatpush.msra.mxu0 0.0
        %840 = vmatpush.msra.mxu0 0.0
        %841 = vmatpush.msra.mxu0 0.0
        %842 = vmatpush.msra.mxu0 0.0
        %843 = vmatpush.msra.mxu0 0.0
        %844 = vmatpush.msra.mxu0 0.0
        %845 = vmatpush.msra.mxu0 0.0
        %846 = vmatpush.msra.mxu0 0.0
        %847 = vmatpush.msra.mxu0 0.0
        %848 = vmatpush.msra.mxu0 0.0
        %849 = vmatpush.msra.mxu0 0.0
        %850 = vmatpush.msra.mxu0 0.0
        %851 = vmatpush.msra.mxu0 0.0
        %852 = vmatpush.msra.mxu0 0.0
        %853 = vmatpush.msra.mxu0 %v833
        %854 = vmatmul.f32.gmra.mxu0 %v836
        %v855 = vpop.f32.mrf.mxu0
        %v856 = vadd.f32 0.0, %v855
        %857 = vdwg.mxu0
        %858 = vrot.lane.b32.xlu0 %v578, 104
        %v859 = vpop.permute.xlu0 %858
        %860 = vrot.lane.b32.xlu0 %v609, 104
        %v861 = vpop.permute.xlu0 %860
        %v862 = vsel %vm642, %v859, 0
        %v864 = vsel %vm642, %v861, 0
        %866 = vmatpush.xpose.msra.mxu0 0.0
        %867 = vmatpush.xpose.msra.mxu0 0.0
        %868 = vmatpush.xpose.msra.mxu0 0.0
        %869 = vmatpush.xpose.msra.mxu0 0.0
        %870 = vmatpush.xpose.msra.mxu0 0.0
        %871 = vmatpush.xpose.msra.mxu0 0.0
        %872 = vmatpush.xpose.msra.mxu0 0.0
        %873 = vmatpush.xpose.msra.mxu0 0.0
        %874 = vmatpush.xpose.msra.mxu0 0.0
        %875 = vmatpush.xpose.msra.mxu0 0.0
        %876 = vmatpush.xpose.msra.mxu0 0.0
        %877 = vmatpush.xpose.msra.mxu0 0.0
        %878 = vmatpush.xpose.msra.mxu0 0.0
        %879 = vmatpush.xpose.msra.mxu0 0.0
        %880 = vmatpush.xpose.msra.mxu0 0.0
        %881 = vmatpush.xpose.msra.mxu0 %v864
        %882 = vmatmul.f32.gmra.mxu0 %v862
        %v883 = vpop.f32.mrf.mxu0
        %v884 = vadd.f32 0.0, %v883
        %885 = vdwg.mxu0
        %v886 = vsel %vm642, %v884, -inf
        %v887 = vrot.slane %v886, 4
        %v888 = vmax.f32 %v886, %v887
        %v889 = vrot.slane %v888, 2
        %v890 = vmax.f32 %v888, %v889
        %v891 = vrot.slane %v890, 1
        %v892 = vmax.f32 %v890, %v891
        %v893 = vsub.f32 %v884, %v892
        %v894 = vmul.f32 %v893, 1.442695
        %v895 = vpow.pop %v894
        %v896 = vsel %vm642, %v895, 0.0
        %v897 = vrot.slane %v896, 4
        %v898 = vadd.f32 %v896, %v897
        %v899 = vrot.slane %v898, 2
        %v900 = vadd.f32 %v898, %v899
        %v901 = vrot.slane %v900, 1
        %v902 = vadd.f32 %v900, %v901
        %v903 = vrcp.pop %v902
        %v904 = vmul.f32 %v895, %v903
        %905 = vrot.lane.b32.xlu0 %v640, 104
        %v906 = vpop.permute.xlu0 %905
        %v909 = vsel %vm642, %v904, 0
        %911 = vmatpush.msra.mxu0 0.0
        %912 = vmatpush.msra.mxu0 0.0
        %913 = vmatpush.msra.mxu0 0.0
        %914 = vmatpush.msra.mxu0 0.0
        %915 = vmatpush.msra.mxu0 0.0
        %916 = vmatpush.msra.mxu0 0.0
        %917 = vmatpush.msra.mxu0 0.0
        %918 = vmatpush.msra.mxu0 0.0
        %919 = vmatpush.msra.mxu0 0.0
        %920 = vmatpush.msra.mxu0 0.0
        %921 = vmatpush.msra.mxu0 0.0
        %922 = vmatpush.msra.mxu0 0.0
        %923 = vmatpush.msra.mxu0 0.0
        %924 = vmatpush.msra.mxu0 0.0
        %925 = vmatpush.msra.mxu0 0.0
        %926 = vmatpush.msra.mxu0 %v906
        %927 = vmatmul.f32.gmra.mxu0 %v909
        %v928 = vpop.f32.mrf.mxu0
        %v929 = vadd.f32 0.0, %v928
        %930 = vdwg.mxu0
        %932 = vrot.lane.b32.xlu0 %v783, 8
        %v933 = vpop.permute.xlu0 %932
        %936 = vrot.lane.b32.xlu0 %v856, 16
        %v937 = vpop.permute.xlu0 %936
        %940 = vrot.lane.b32.xlu0 %v929, 24
        %v941 = vpop.permute.xlu0 %940
        %v943 = vsel %vm642, %v709, %v933
        %vm944 = vcmask 130048
        %v945 = vsel %vm944, %v943, %v937
        %vm946 = vcmask 195584
        %v947 = vsel %vm946, %v945, %v941
        %v948 = vld [vmem:[#allocation13] sm:$0xff]
        %v949 = vld [vmem:[#allocation13 + $0x8] sm:$0xff]
        %v950 = vld [vmem:[#allocation13 + $0x10] sm:$0xff]
        %v951 = vld [vmem:[#allocation13 + $0x18] sm:$0xff]
        %v952 = vld [vmem:[%s10] sm:$0x1]
        %v954 = vperm.slane %v952, 0
        %v957 = vsel %vm556, %v947, 0
        %959 = vmatpush.msra.mxu0 0.0
        %960 = vmatpush.msra.mxu0 0.0
        %961 = vmatpush.msra.mxu0 0.0
        %962 = vmatpush.msra.mxu0 0.0
        %963 = vmatpush.msra.mxu0 0.0
        %964 = vmatpush.msra.mxu0 0.0
        %965 = vmatpush.msra.mxu0 0.0
        %966 = vmatpush.msra.mxu0 0.0
        %967 = vmatpush.msra.mxu0 0.0
        %968 = vmatpush.msra.mxu0 0.0
        %969 = vmatpush.msra.mxu0 0.0
        %970 = vmatpush.msra.mxu0 0.0
        %971 = vmatpush.msra.mxu0 %v951
        %972 = vmatpush.msra.mxu0 %v950
        %973 = vmatpush.msra.mxu0 %v949
        %974 = vmatpush.msra.mxu0 %v948
        %975 = vmatmul.f32.gmra.mxu0 %v957
        %v976 = vpop.f32.mrf.mxu0
        %v977 = vadd.f32 %v954, %v976
        %978 = vdwg.mxu0
        %979 = vst [vmem:[%s544] sm:$0xff] %v977
        %s980 = sand.u32 %s287, 1
        %s981 = scalar_lea.sflag [#allocation4], %s980
        %s982 = sand.u32 %s287, 1
        %s983 = smul.addr %s982, 8
        %s984 = scalar_lea.vmem [#allocation14], %s983
        // Predicated region
        $region93: #{tpu_custom_call.1} parent=63 // pred_check
          %p985 = pneg %p297
        $region94: #{tpu_custom_call.1} parent=63 // pred_check_branch
          %987 = sbr.rel (%p985) target = $region96
        $region95: #{tpu_custom_call.1} parent=63 // pred_region
          %989 = vsyncadd %s981, 0
          %s990 = smul.addr %s33, 8
          %s991 = scalar_lea.hbm %s11, %s990
          %s993 = sshll.u32 %s984, 4
          %s994 = int_to_ptr.vmem [resolvable:$true] %s993
          %s995 = sshll.u32 %s991, 4
          %s996 = int_to_ptr.hbm [resolvable:$true] %s995
          %998 = dma.vmem_to_hbm [thread:$0]  %s994, 128, %s996, %s981
        $region96: #{tpu_custom_call.1} parent=63 // pred_fallthru
          _
      $region64: #{tpu_custom_call.1} parent=5 // pred_fallthru
        _
      %p999 = scmp.le.s32.totalorder 2, %s28
      // Predicated region
      $region97: #{tpu_custom_call.1} parent=5 // pred_check
        %p1000 = pneg %p999
      $region98: #{tpu_custom_call.1} parent=5 // pred_check_branch
        %1002 = sbr.rel (%p1000) target = $region100
      $region99: #{tpu_custom_call.1} parent=5 // pred_region
        %s1003 = ssub.s32 %s28, 2
        // Predicated region
        $region101: #{tpu_custom_call.1} parent=99 // pred_check
          %p1004 = pneg %p303
        $region102: #{tpu_custom_call.1} parent=99 // pred_check_branch
          %1006 = sbr.rel (%p1004) target = $region104
        $region103: #{tpu_custom_call.1} parent=99 // pred_region
          %s1007 = sand.u32 %s288, 1
          %s1008 = scalar_lea.sflag [#allocation4], %s1007
          %s1009 = sand.u32 %s288, 1
          %s1010 = smul.addr %s1009, 8
          %s1011 = scalar_lea.vmem [#allocation14], %s1010
          %1013 = dma.done %s1008, 128
        $region104: #{tpu_custom_call.1} parent=99 // pred_fallthru
          _
      $region100: #{tpu_custom_call.1} parent=5 // pred_fallthru
        _
    $region6: #{tpu_custom_call.1} parent=1 // loop_footer
      %s32 = sadd.s32 1, %s28
    $region7: #{tpu_custom_call.1} parent=1 // loop_footer_branch
      %27 = sbr.rel target = $region3
    $region8: #{tpu_custom_call.1} parent=1 // loop_exit
      _
    %1014 = vsyncpa [#allocation3], 1
    %s1015 = scalar_lea.sflag [#allocation3], 1
    %1016 = vsyncpa %s1015, 1
    %1017 = vsyncpa [#allocation6], 1
    %s1018 = scalar_lea.sflag [#allocation6], 1
    %1019 = vsyncpa %s1018, 1
    %1020 = vsyncpa [#allocation9], 1
    %1021 = vsyncpa [#allocation12], 1
    %1022 = vsyncpa [#allocation4], 1
    %s1023 = scalar_lea.sflag [#allocation4], 1
    %1024 = vsyncpa %s1023, 1

</llo_original>
